<compile_context>
chip_gen: v7x
topology: tpu7x:2x2x1
jax: 0.10.0
libtpu: 0.0.40
codegen_flags: <defaults>
</compile_context>

<pallas_src>
import math

import jax
import jax.numpy as jnp
from jax.experimental import pallas as pl
from jax.experimental.pallas import tpu as pltpu


def _relu_kernel(x_ref, o_ref):
    # One VPU max per vreg on the current VMEM tile; HBM-DMA-bound everywhere.
    o_ref[...] = jnp.maximum(x_ref[...], 0)


def _round_up(v: int, m: int) -> int:
    return -(-v // m) * m


def _vmem_params():
    """Generation-aware (tile_target_bytes, vmem_limit_bytes).

    v7x (64 MiB physical VMEM): ~10 MiB tiles, 48 MiB scoped limit
    (4 x tile double-buffered = 40 MiB, >=16 MiB left for compiler scratch).
    v5e/v6e (128 MiB physical): 12 MiB tiles, 64 MiB scoped limit.
    NOTE: the explicit vmem_limit_bytes raise is load-bearing on v5e, whose
    default scoped limit is only 16 MiB — keep it through refactors.
    """
    phys = 64 << 20  # assume the smallest generation (v7x) if the query fails
    try:
        phys = int(pltpu.get_tpu_info().vmem_capacity_bytes)
    except Exception:
        pass
    if phys <= (64 << 20):            # v7x-class
        return 10 << 20, 48 << 20
    return 12 << 20, 64 << 20         # v5e / v6e


def qrelu_forward(x: jax.Array, training: bool = False, *,
                  force_pallas: bool = False) -> jax.Array:
    """Forward pass of QReLU: exact ReLU in both train and eval mode.

    Small tensors (and shapes this simple leading-dim blocking can't tile
    within VMEM) return jnp.maximum(x, 0) so XLA can fuse the ReLU into the
    producer op — that eliminates the HBM round-trip entirely, which no
    standalone kernel can match.
    """
    # TODO(synk): qrelu's custom *backward* (quantized "bit" gradient) is not
    # part of the forward pass and is not implemented; under jax.grad callers
    # get the default ReLU gradient.
    del training  # forward is identical in both modes

    total = x.size
    itemsize = jnp.dtype(x.dtype).itemsize

    if total == 0:
        return x

    # Below ~4 MiB the whole tensor streams through HBM in a few microseconds;
    # launch overhead and lost producer fusion dominate — use XLA.
    if not force_pallas and total * itemsize < (4 << 20):
        return jnp.maximum(x, 0).astype(x.dtype)

    if x.ndim < 2:
        # TODO(synk): 0/1-D inputs would need a (potentially relayouting)
        # reshape to form a 2-D view; fall back to XLA's fused maximum.
        return jnp.maximum(x, 0).astype(x.dtype)

    tile_target, vmem_limit = _vmem_params()

    lead = x.shape[0]
    rest = tuple(x.shape[1:])
    row_bytes = math.prod(rest) * itemsize

    # Granularity of the blocked (leading) dim.  For 2-D inputs it is the
    # second-to-last dim, so it must honor sublane packing; for ndim >= 3 the
    # last two dims are taken whole and any row count is legal.
    step = max(8, 32 // itemsize) if x.ndim == 2 else 1

    if 4 * step * row_bytes > vmem_limit:
        # Even the smallest legal tile (double-buffered in + out) would blow
        # the scoped-VMEM budget with leading-dim-only blocking.
        # TODO(synk): blocking further (trailing) dims is not implemented.
        return jnp.maximum(x, 0).astype(x.dtype)

    # Byte-budgeted tile over the leading axis of the ORIGINAL array — no
    # wrapper reshape, so no risk of a hidden HBM relayout copy.
    tile_rows = max(step, (tile_target // row_bytes) // step * step)
    tile_rows = min(tile_rows, lead)

    # v7x megacore: with dimension_semantics=("parallel",) the grid is sharded
    # across both TensorCores, so avoid a single-block grid and prefer an even
    # grid length.  Neutral on single-TC v5e/v6e.
    if tile_rows == lead and lead >= 2 * step:
        tile_rows = min(lead, _round_up(pl.cdiv(lead, 2), step))
    n_blocks = pl.cdiv(lead, tile_rows)
    if n_blocks > 1 and n_blocks % 2 == 1:
        t = tile_rows
        for _ in range(8):                     # bounded search for an even grid
            t -= step
            if t < step:
                break
            if pl.cdiv(lead, t) % 2 == 0:
                tile_rows = t
                break
    n_blocks = pl.cdiv(lead, tile_rows)

    block_shape = (tile_rows,) + rest
    zeros_tail = (0,) * (x.ndim - 1)
    index_map = lambda i, _z=zeros_tail: (i,) + _z

    return pl.pallas_call(
        _relu_kernel,
        out_shape=jax.ShapeDtypeStruct(x.shape, x.dtype),
        grid=(n_blocks,),
        in_specs=[pl.BlockSpec(block_shape, index_map)],
        out_specs=pl.BlockSpec(block_shape, index_map),
        compiler_params=pltpu.CompilerParams(
            # Parallel grid axis shards across both TensorCores on v7x.
            dimension_semantics=("parallel",),
            vmem_limit_bytes=vmem_limit,
        ),
    )(x)


if __name__ == "__main__":
    key = jax.random.PRNGKey(0)
    # NCHW activation, small: batch=2, channels=4, spatial=16x16.
    x = jax.random.normal(key, (2, 4, 16, 16), dtype=jnp.float32)
    ref = jnp.maximum(x, 0.0)

    # Exercise the Pallas path explicitly (default dispatch takes the XLA
    # producer-fusion fast path at this tiny size).
    y = qrelu_forward(x, training=True, force_pallas=True)
    jax.block_until_ready(y)
    assert y.shape == x.shape and y.dtype == x.dtype
    assert jnp.allclose(y, ref)

    # Ragged / odd leading dim through the Pallas path (masked last block).
    x2 = jax.random.normal(jax.random.PRNGKey(1), (5, 4, 16, 16), jnp.float32)
    y2 = qrelu_forward(x2, training=True, force_pallas=True)
    jax.block_until_ready(y2)
    assert jnp.allclose(y2, jnp.maximum(x2, 0.0))

    # 2-D path (sublane-aligned leading-dim tiles, lane-dense trailing dim).
    x3 = jax.random.normal(jax.random.PRNGKey(2), (64, 256), jnp.float32)
    y3 = qrelu_forward(x3, training=True, force_pallas=True)
    jax.block_until_ready(y3)
    assert jnp.allclose(y3, jnp.maximum(x3, 0.0))

    # Default dispatch (XLA fusion fast path for small tensors) must agree.
    y4 = qrelu_forward(x, training=False)
    jax.block_until_ready(y4)
    assert jnp.allclose(y4, ref)

    print("KERNEL_OK")
</pallas_src>

<mosaic_0001>
module attributes {stable_mosaic.version = 11 : i64} {
  func.func @_relu_kernel(%arg0: i32, %arg1: memref<1x4x16x16xf32, #tpu.memory_space<vmem>>, %arg2: memref<1x4x16x16xf32, #tpu.memory_space<vmem>>) attributes {dimension_semantics = [#tpu.dimension_semantics<parallel>], iteration_bounds = array<i64: 2>, scalar_prefetch = 0 : i64, scratch_operands = 0 : i64, tpu.core_type = #tpu.core_type<tc>, window_params = [{transform_indices = @transform_0, window_bounds = array<i64: 1, 4, 16, 16>}, {transform_indices = @transform_1, window_bounds = array<i64: 1, 4, 16, 16>}]} {
    %c0 = arith.constant 0 : index
    %c0_0 = arith.constant 0 : index
    %c0_1 = arith.constant 0 : index
    %c0_2 = arith.constant 0 : index
    %0 = vector.load %arg1[%c0, %c0_0, %c0_1, %c0_2] : memref<1x4x16x16xf32, #tpu.memory_space<vmem>>, vector<1x4x16x16xf32>
    %cst = arith.constant 0.000000e+00 : f32
    %1 = vector.broadcast %cst : f32 to vector<1x4x16x16xf32>
    %2 = arith.maximumf %0, %1 : vector<1x4x16x16xf32>
    %c0_3 = arith.constant 0 : index
    %c0_4 = arith.constant 0 : index
    %c0_5 = arith.constant 0 : index
    %c0_6 = arith.constant 0 : index
    %3 = vector.load %arg2[%c0_3, %c0_4, %c0_5, %c0_6] : memref<1x4x16x16xf32, #tpu.memory_space<vmem>>, vector<1x4x16x16xf32>
    tpu.vector_store %arg2[%c0_3, %c0_4, %c0_5, %c0_6], %2 {strides = array<i32>} : memref<1x4x16x16xf32, #tpu.memory_space<vmem>>, vector<1x4x16x16xf32>,
    return
  }
  func.func @transform_0(%arg0: i32) -> (i32, i32, i32, i32) {
    %c0_i32 = arith.constant 0 : i32
    %c0_i32_0 = arith.constant 0 : i32
    %c0_i32_1 = arith.constant 0 : i32
    %c0_i32_2 = arith.constant 0 : i32
    return %arg0, %c0_i32, %c0_i32_0, %c0_i32_1 : i32, i32, i32, i32
  }
  func.func @transform_1(%arg0: i32) -> (i32, i32, i32, i32) {
    %c0_i32 = arith.constant 0 : i32
    %c0_i32_0 = arith.constant 0 : i32
    %c0_i32_1 = arith.constant 0 : i32
    %c0_i32_2 = arith.constant 0 : i32
    return %arg0, %c0_i32, %c0_i32_0, %c0_i32_1 : i32, i32, i32, i32
  }
}

</mosaic_0001>

<llo_original>
// kernel: tpu_custom_call.1
$region0: #{tpu_custom_call.1}
  #allocation0 [shape = 'u32[]', space=smem, size = 0x4, offset = 0x4, fixed_abs, tag = 'smem constant byte address 0x4 - core index']
  #allocation1 [shape = 'u32[144,128]{1,0:T(1,128)}', space=vmem, size = 0x12000, scoped, tag = 'internal scratch']
  %s0 = inlined_call_operand.hbm [shape: f32[2,4,16,16], index: 0, kind: input, shape index: {}]
  %s1 = inlined_call_operand.hbm [shape: f32[2,4,16,16], index: 1, kind: output, shape index: {}]
  %s2 = sld [smem:[#allocation0]]
  $region41: #{tpu_custom_call.1} parent=0
    _
  %s4 = ssub.s32 1, %s2
  %s5 = scalar_select 0, %s4, %s2
  $region1: #{tpu_custom_call.1} parent=0
    #allocation2 [shape = 'u8[65536]{0}', space=vmem, size = 0x10000, scoped, tag = 'input window, operand 0']
    #allocation3 [shape = 's32[2]{0}', space=sflag, size = 0x8, scoped, tag = 'scoped memory for tpu_custom_call.1']
    #allocation4 [shape = 's32[2]{0}', space=sflag, size = 0x8, scoped, tag = 'scoped memory for tpu_custom_call.1']
    #allocation5 [shape = 'u8[65536]{0}', space=vmem, size = 0x10000, scoped, tag = 'output window, operand 0']
    %6 = vsyncpa [#allocation3], 0
    %s7 = scalar_lea.sflag [#allocation3], 1
    %8 = vsyncpa %s7, 0
    %9 = vsyncpa [#allocation4], 0
    %s10 = scalar_lea.sflag [#allocation4], 1
    %11 = vsyncpa %s10, 0
    loop: start=0, step=1, limit=4
    $region2: #{tpu_custom_call.1} parent=1 // loop_pre_header
      _
    $region3: #{tpu_custom_call.1} parent=1 // loop_header
      %s13 = sphi 0, %s17
      %p14 = scmp.ge.s32.totalorder %s13, 4
      %s23 = sphi 0, %s25
      %s26 = sphi 0, %s23
      %s27 = sphi 0, %s26
      %s43 = sphi 0, %s27
      %s49 = sphi 0, %s51
      %s52 = sphi 0, %s49
      %s53 = sphi 0, %s52
      %s69 = sphi 0, %s53
    $region4: #{tpu_custom_call.1} parent=1 // loop_header_branch
      %16 = sbr.rel (%p14) target = $region8
    $region5: #{tpu_custom_call.1} parent=1 // loop_body
      %s18 = ssub.s32 %s13, 1
      %s19 = ssub.s32 %s13, 2
      %s20 = sadd.s32 %s13, 1
      %s21 = ssub.s32 %s13, %s20
      %p22 = scmp.eq.s32.totalorder %s21, 0
      %s24 = sadd.s32 %s23, 1
      %s25 = scalar_select %p22, %s23, %s24
      %p28 = pneg %p22
      %p29 = scmp.eq.s32.totalorder %s13, 1
      %p30 = por %p28, %p29
      %p31 = scmp.ne.s32.totalorder %s23, %s26
      %p32 = scmp.eq.s32.totalorder %s13, 0
      %p33 = por %p31, %p32
      %p34 = scmp.ne.s32.totalorder %s23, %s26
      %p35 = scmp.eq.s32.totalorder %s18, 1
      %p36 = por %p34, %p35
      %p37 = scmp.ne.s32.totalorder %s26, %s27
      %p38 = scmp.eq.s32.totalorder %s18, 0
      %p39 = por %p37, %p38
      %p40 = scmp.ne.s32.totalorder %s26, %s27
      %p41 = scmp.eq.s32.totalorder %s19, 1
      %p42 = por %p40, %p41
      %p44 = scmp.ne.s32.totalorder %s27, %s43
      %p45 = scmp.eq.s32.totalorder %s19, 0
      %p46 = por %p44, %p45
      %s47 = ssub.s32 %s13, %s20
      %p48 = scmp.eq.s32.totalorder %s47, 0
      %s50 = sadd.s32 %s49, 1
      %s51 = scalar_select %p48, %s49, %s50
      %p54 = pneg %p48
      %p55 = scmp.eq.s32.totalorder %s13, 1
      %p56 = por %p54, %p55
      %p57 = scmp.ne.s32.totalorder %s49, %s52
      %p58 = scmp.eq.s32.totalorder %s13, 0
      %p59 = por %p57, %p58
      %p60 = scmp.ne.s32.totalorder %s49, %s52
      %p61 = scmp.eq.s32.totalorder %s18, 1
      %p62 = por %p60, %p61
      %p63 = scmp.ne.s32.totalorder %s52, %s53
      %p64 = scmp.eq.s32.totalorder %s18, 0
      %p65 = por %p63, %p64
      %p66 = scmp.ne.s32.totalorder %s52, %s53
      %p67 = scmp.eq.s32.totalorder %s19, 1
      %p68 = por %p66, %p67
      %p70 = scmp.ne.s32.totalorder %s53, %s69
      %p71 = scmp.eq.s32.totalorder %s19, 0
      %p72 = por %p70, %p71
      %p73 = scmp.le.s32.totalorder 1, %s13
      %p74 = scmp.lt.s32.totalorder %s13, 3
      %p75 = pnand %p73, %p74
      %p76 = pneg %p75
      // Predicated region
      $region9: #{tpu_custom_call.1} parent=5 // pred_check
        _
      $region10: #{tpu_custom_call.1} parent=5 // pred_check_branch
        %78 = sbr.rel (%p75) target = $region12
      $region11: #{tpu_custom_call.1} parent=5 // pred_region
        %s79 = ssub.s32 %s13, 1
      $region12: #{tpu_custom_call.1} parent=5 // pred_fallthru
        _
      %p80 = scmp.lt.s32.totalorder %s13, 2
      // Predicated region
      $region13: #{tpu_custom_call.1} parent=5 // pred_check
        %p81 = pneg %p80
      $region14: #{tpu_custom_call.1} parent=5 // pred_check_branch
        %83 = sbr.rel (%p81) target = $region16
      $region15: #{tpu_custom_call.1} parent=5 // pred_region
        // Predicated region
        $region17: #{tpu_custom_call.1} parent=15 // pred_check
          %p84 = pneg %p33
        $region18: #{tpu_custom_call.1} parent=15 // pred_check_branch
          %86 = sbr.rel (%p84) target = $region20
        $region19: #{tpu_custom_call.1} parent=15 // pred_region
          %s87 = sand.u32 %s23, 1
          %s88 = scalar_lea.sflag [#allocation3], %s87
          %s89 = sand.u32 %s23, 1
          %s90 = smul.addr %s89, 64
          %s91 = scalar_lea.vmem [#allocation2], %s90
          %s93 = ssub.s32 1024, 1024
          %94 = vsyncadd %s88, %s93
          %s95 = smul.addr %s13, 8
          %s96 = smul.addr %s95, 128
          %s97 = scalar_lea.hbm %s0, %s96
          %s98 = sshll.u32 %s91, 4
          %s99 = int_to_ptr.vmem [resolvable:$true] %s98
          %104 = dma.hbm_to_vmem [thread:$0]  %s97, 1024, %s99, %s88, 128, 128, 8
        $region20: #{tpu_custom_call.1} parent=15 // pred_fallthru
          _
      $region16: #{tpu_custom_call.1} parent=5 // pred_fallthru
        _
      %p105 = scmp.le.s32.totalorder 1, %s13
      %p106 = scmp.lt.s32.totalorder %s13, 3
      %p107 = pnand %p105, %p106
      %p108 = pneg %p107
      // Predicated region
      $region21: #{tpu_custom_call.1} parent=5 // pred_check
        _
      $region22: #{tpu_custom_call.1} parent=5 // pred_check_branch
        %110 = sbr.rel (%p107) target = $region24
      $region23: #{tpu_custom_call.1} parent=5 // pred_region
        %s111 = ssub.s32 %s13, 1
        %s112 = sand.u32 %s26, 1
        %s113 = scalar_lea.sflag [#allocation3], %s112
        %s114 = sand.u32 %s26, 1
        %s115 = smul.addr %s114, 64
        %s116 = scalar_lea.vmem [#allocation2], %s115
        // Predicated region
        $region25: #{tpu_custom_call.1} parent=23 // pred_check
          %p117 = pneg %p39
        $region26: #{tpu_custom_call.1} parent=23 // pred_check_branch
          %119 = sbr.rel (%p117) target = $region28
        $region27: #{tpu_custom_call.1} parent=23 // pred_region
          %120 = dma.done %s113, 1024
        $region28: #{tpu_custom_call.1} parent=23 // pred_fallthru
          _
        %s121 = sand.u32 %s26, 1
        %s122 = scalar_lea.sflag [#allocation3], %s121
        %s123 = sand.u32 %s26, 1
        %s124 = smul.addr %s123, 64
        %s125 = scalar_lea.vmem [#allocation2], %s124
        %p126 = pneg %p39
        %p127 = pneg %p36
        %p128 = pneg %p65
        %p129 = pneg %p62
        %s130 = sand.u32 %s52, 1
        %s131 = scalar_lea.sflag [#allocation4], %s130
        %s132 = sand.u32 %s52, 1
        %s133 = smul.addr %s132, 64
        %s134 = scalar_lea.vmem [#allocation5], %s133
        %v135 = vld [vmem:[%s116] sm:$0xff]
        %v136 = vld [vmem:[%s116 + $0x8] sm:$0xff]
        %v137 = vld [vmem:[%s116 + $0x10] sm:$0xff]
        %v138 = vld [vmem:[%s116 + $0x18] sm:$0xff]
        %v139 = vld [vmem:[%s116 + $0x20] sm:$0xff]
        %v140 = vld [vmem:[%s116 + $0x28] sm:$0xff]
        %v141 = vld [vmem:[%s116 + $0x30] sm:$0xff]
        %v142 = vld [vmem:[%s116 + $0x38] sm:$0xff]
        %v143 = vmax.f32 %v135, 0.0
        %v144 = vmax.f32 %v136, 0.0
        %v145 = vmax.f32 %v137, 0.0
        %v146 = vmax.f32 %v138, 0.0
        %v147 = vmax.f32 %v139, 0.0
        %v148 = vmax.f32 %v140, 0.0
        %v149 = vmax.f32 %v141, 0.0
        %v150 = vmax.f32 %v142, 0.0
        %vm151 = vcmask 130048
        %152 = vst.msk [vmem:[%s134] sm:$0xff] %vm151, %v143
        %153 = vst.msk [vmem:[%s134 + $0x8] sm:$0xff] %vm151, %v144
        %154 = vst.msk [vmem:[%s134 + $0x10] sm:$0xff] %vm151, %v145
        %155 = vst.msk [vmem:[%s134 + $0x18] sm:$0xff] %vm151, %v146
        %156 = vst.msk [vmem:[%s134 + $0x20] sm:$0xff] %vm151, %v147
        %157 = vst.msk [vmem:[%s134 + $0x28] sm:$0xff] %vm151, %v148
        %158 = vst.msk [vmem:[%s134 + $0x30] sm:$0xff] %vm151, %v149
        %159 = vst.msk [vmem:[%s134 + $0x38] sm:$0xff] %vm151, %v150
        %s160 = sand.u32 %s52, 1
        %s161 = scalar_lea.sflag [#allocation4], %s160
        %s162 = sand.u32 %s52, 1
        %s163 = smul.addr %s162, 64
        %s164 = scalar_lea.vmem [#allocation5], %s163
        // Predicated region
        $region29: #{tpu_custom_call.1} parent=23 // pred_check
          %p165 = pneg %p62
        $region30: #{tpu_custom_call.1} parent=23 // pred_check_branch
          %167 = sbr.rel (%p165) target = $region32
        $region31: #{tpu_custom_call.1} parent=23 // pred_region
          %s169 = ssub.s32 1024, 1024
          %170 = vsyncadd %s161, %s169
          %s171 = smul.addr %s18, 8
          %s172 = smul.addr %s171, 128
          %s173 = scalar_lea.hbm %s1, %s172
          %s174 = sshll.u32 %s164, 4
          %s175 = int_to_ptr.vmem [resolvable:$true] %s174
          %180 = dma.vmem_to_hbm [thread:$0]  %s175, 1024, %s173, %s161, 128, 128, 8
        $region32: #{tpu_custom_call.1} parent=23 // pred_fallthru
          _
      $region24: #{tpu_custom_call.1} parent=5 // pred_fallthru
        _
      %p181 = scmp.le.s32.totalorder 2, %s13
      // Predicated region
      $region33: #{tpu_custom_call.1} parent=5 // pred_check
        %p182 = pneg %p181
      $region34: #{tpu_custom_call.1} parent=5 // pred_check_branch
        %184 = sbr.rel (%p182) target = $region36
      $region35: #{tpu_custom_call.1} parent=5 // pred_region
        %s185 = ssub.s32 %s13, 2
        // Predicated region
        $region37: #{tpu_custom_call.1} parent=35 // pred_check
          %p186 = pneg %p68
        $region38: #{tpu_custom_call.1} parent=35 // pred_check_branch
          %188 = sbr.rel (%p186) target = $region40
        $region39: #{tpu_custom_call.1} parent=35 // pred_region
          %s189 = sand.u32 %s53, 1
          %s190 = scalar_lea.sflag [#allocation4], %s189
          %s191 = sand.u32 %s53, 1
          %s192 = smul.addr %s191, 64
          %s193 = scalar_lea.vmem [#allocation5], %s192
          %194 = dma.done %s190, 1024
        $region40: #{tpu_custom_call.1} parent=35 // pred_fallthru
          _
      $region36: #{tpu_custom_call.1} parent=5 // pred_fallthru
        _
    $region6: #{tpu_custom_call.1} parent=1 // loop_footer
      %s17 = sadd.s32 1, %s13
    $region7: #{tpu_custom_call.1} parent=1 // loop_footer_branch
      %12 = sbr.rel target = $region3
    $region8: #{tpu_custom_call.1} parent=1 // loop_exit
      _
    %195 = vsyncpa [#allocation3], 1
    %s196 = scalar_lea.sflag [#allocation3], 1
    %197 = vsyncpa %s196, 1
    %198 = vsyncpa [#allocation4], 1
    %s199 = scalar_lea.sflag [#allocation4], 1
    %200 = vsyncpa %s199, 1

</llo_original>
